<compile_context>
chip_gen: v6e
topology: v6e:2x2x1
jax: 0.10.0
libtpu: 0.0.40
codegen_flags: <defaults>
</compile_context>

<pallas_src>
import jax
import jax.numpy as jnp
from jax.experimental import pallas as pl
from jax.experimental.pallas import tpu as pltpu

UNITS = 32
HALF = UNITS // 2              # 16
STATE_DIM = 2
CONTROL_DIM = 7
OBS_POSE_DIM = 7
OBS_SENSORS_DIM = 7
IMG_H = IMG_W = 32             # implied by Linear(1024, units); branch is dead (x * 0)

FRONT = 2 * HALF + 2 * UNITS   # 96 = [state 16 | control 16 | pose 32 | sensors 32]
OUT_W = 128                    # lane-dense padded output width (real outputs in cols 0:2)

# ---- WF slab row offsets (232 x 96): front-end weights / biases / relu mask ----
_F_S0, _F_C0, _F_P0, _F_G0 = 0, 8, 16, 24          # first Linears (8-aligned row starts)
_F_W1, _F_W2 = 32, 32 + FRONT                      # block-diag resblock L1 / L2 (96x96)
_F_B0, _F_B1, _F_B2, _F_MASK = 224, 225, 226, 227  # bias rows + relu mask row
WF_ROWS = 232

# ---- WS slab row offsets (264 x 128): shared layers + output head ----
_S_W0 = 0                      # Linear(96->32), cols 0:32
_S_R1A, _S_R1B = 96, 128       # shared resblock 1
_S_R2A, _S_R2B = 160, 192      # shared resblock 2
_S_WO = 224                    # Linear(32->2) padded to (32,128)
_S_B0, _S_B1A, _S_B1B, _S_B2A, _S_B2B, _S_BO = 256, 257, 258, 259, 260, 261
WS_ROWS = 264


def _round_up(x, m):
    return (x + m - 1) // m * m


# --------------------------------- kernel ----------------------------------

def panda_kernel(s_ref, c_ref, p_ref, g_ref, wf_ref, ws_ref, o_ref):
    relu = lambda v: jnp.maximum(v, 0.0)
    dot = lambda a, b: jnp.dot(a, b, preferred_element_type=jnp.float32)

    # Fused per-branch first Linears: each branch owns a disjoint column block of
    # the 96-wide feature vector, so the "concat" happens for free via accumulation.
    h0 = (dot(s_ref[...], wf_ref[_F_S0:_F_S0 + STATE_DIM, :])
          + dot(c_ref[...], wf_ref[_F_C0:_F_C0 + CONTROL_DIM, :])
          + dot(p_ref[...], wf_ref[_F_P0:_F_P0 + OBS_POSE_DIM, :])
          + dot(g_ref[...], wf_ref[_F_G0:_F_G0 + OBS_SENSORS_DIM, :])
          + wf_ref[_F_B0:_F_B0 + 1, :])
    # state/control columns [0,32) have a ReLU after the first Linear; pose/sensors
    # columns do not (matches the torch Sequentials). Precomputed 0/1 mask row.
    mask = wf_ref[_F_MASK:_F_MASK + 1, :]
    h0 = h0 - mask * jnp.minimum(h0, 0.0)

    # Fused per-branch resblocks (block-diagonal 96x96): x + relu(L2(relu(L1(x)))).
    t = relu(dot(h0, wf_ref[_F_W1:_F_W1 + FRONT, :]) + wf_ref[_F_B1:_F_B1 + 1, :])
    t = relu(dot(t, wf_ref[_F_W2:_F_W2 + FRONT, :]) + wf_ref[_F_B2:_F_B2 + 1, :])
    feat = h0 + t                                               # (tile, 96)

    # Shared layers: Linear(96->32)+ReLU, 2x resblock(32), Linear(32->2 padded to 128).
    w32 = lambda r, k: ws_ref[r:r + k, 0:UNITS]
    b32 = lambda r: ws_ref[r:r + 1, 0:UNITS]
    h = relu(dot(feat, w32(_S_W0, FRONT)) + b32(_S_B0))
    t = relu(dot(h, w32(_S_R1A, UNITS)) + b32(_S_B1A))
    t = relu(dot(t, w32(_S_R1B, UNITS)) + b32(_S_B1B))
    h = h + t
    t = relu(dot(h, w32(_S_R2A, UNITS)) + b32(_S_B2A))
    t = relu(dot(t, w32(_S_R2B, UNITS)) + b32(_S_B2B))
    h = h + t
    # Lane-dense (tile,128) store; real outputs live in columns 0:2.
    o_ref[...] = dot(h, ws_ref[_S_WO:_S_WO + UNITS, :]) + ws_ref[_S_BO:_S_BO + 1, :]


# ----------------------------- parameter init ------------------------------

def _init_linear(key, fan_in, fan_out):
    kw, kb = jax.random.split(key)
    bound = float(fan_in) ** -0.5
    w = jax.random.uniform(kw, (fan_in, fan_out), jnp.float32, -bound, bound)
    b = jax.random.uniform(kb, (fan_out,), jnp.float32, -bound, bound)
    return w, b


def make_params(key):
    """Per-layer params mirroring the torch module (image branch omitted: dead)."""
    ks = iter(jax.random.split(key, 32))
    p = {}
    p["state0"] = _init_linear(next(ks), STATE_DIM, HALF)
    p["state_r1"] = _init_linear(next(ks), HALF, HALF)
    p["state_r2"] = _init_linear(next(ks), HALF, HALF)
    p["ctrl0"] = _init_linear(next(ks), CONTROL_DIM, HALF)
    p["ctrl_r1"] = _init_linear(next(ks), HALF, HALF)
    p["ctrl_r2"] = _init_linear(next(ks), HALF, HALF)
    p["pose0"] = _init_linear(next(ks), OBS_POSE_DIM, UNITS)
    p["pose_r1"] = _init_linear(next(ks), UNITS, UNITS)
    p["pose_r2"] = _init_linear(next(ks), UNITS, UNITS)
    p["sens0"] = _init_linear(next(ks), OBS_SENSORS_DIM, UNITS)
    p["sens_r1"] = _init_linear(next(ks), UNITS, UNITS)
    p["sens_r2"] = _init_linear(next(ks), UNITS, UNITS)
    # shared first Linear: rows in torch concat order [state|image|pose|sensors|control]
    p["sh0"] = _init_linear(next(ks), 2 * HALF + 3 * UNITS, UNITS)
    p["sh_r1a"] = _init_linear(next(ks), UNITS, UNITS)
    p["sh_r1b"] = _init_linear(next(ks), UNITS, UNITS)
    p["sh_r2a"] = _init_linear(next(ks), UNITS, UNITS)
    p["sh_r2b"] = _init_linear(next(ks), UNITS, UNITS)
    p["out"] = _init_linear(next(ks), UNITS, STATE_DIM)
    return p


def pack_params(p):
    """Pack the per-layer params into the 2 slabs consumed by the kernel."""
    def blkdiag(blocks, total):
        w = jnp.zeros((total, total), jnp.float32)
        off = 0
        for b in blocks:
            k = b.shape[0]
            w = w.at[off:off + k, off:off + k].set(b)
            off += k
        return w

    wf = jnp.zeros((WF_ROWS, FRONT), jnp.float32)
    wf = wf.at[_F_S0:_F_S0 + STATE_DIM, 0:HALF].set(p["state0"][0])
    wf = wf.at[_F_C0:_F_C0 + CONTROL_DIM, HALF:2 * HALF].set(p["ctrl0"][0])
    wf = wf.at[_F_P0:_F_P0 + OBS_POSE_DIM, 2 * HALF:2 * HALF + UNITS].set(p["pose0"][0])
    wf = wf.at[_F_G0:_F_G0 + OBS_SENSORS_DIM, 2 * HALF + UNITS:FRONT].set(p["sens0"][0])
    wf = wf.at[_F_W1:_F_W1 + FRONT, :].set(
        blkdiag([p["state_r1"][0], p["ctrl_r1"][0], p["pose_r1"][0], p["sens_r1"][0]], FRONT))
    wf = wf.at[_F_W2:_F_W2 + FRONT, :].set(
        blkdiag([p["state_r2"][0], p["ctrl_r2"][0], p["pose_r2"][0], p["sens_r2"][0]], FRONT))
    wf = wf.at[_F_B0, :].set(jnp.concatenate(
        [p["state0"][1], p["ctrl0"][1], p["pose0"][1], p["sens0"][1]]))
    wf = wf.at[_F_B1, :].set(jnp.concatenate(
        [p["state_r1"][1], p["ctrl_r1"][1], p["pose_r1"][1], p["sens_r1"][1]]))
    wf = wf.at[_F_B2, :].set(jnp.concatenate(
        [p["state_r2"][1], p["ctrl_r2"][1], p["pose_r2"][1], p["sens_r2"][1]]))
    wf = wf.at[_F_MASK, :].set(jnp.concatenate(
        [jnp.ones((2 * HALF,), jnp.float32), jnp.zeros((2 * UNITS,), jnp.float32)]))

    ws = jnp.zeros((WS_ROWS, OUT_W), jnp.float32)
    # Shared first Linear: reorder torch rows [state|image|pose|sensors|control] to the
    # fused feature layout [state|control|pose|sensors]; image rows dropped because that
    # feature block is exactly zero (branch output * 0).
    wsh0 = p["sh0"][0]                                           # (128, 32)
    wsh0_r = jnp.concatenate(
        [wsh0[0:16], wsh0[112:128], wsh0[48:80], wsh0[80:112]], axis=0)   # (96, 32)
    ws = ws.at[_S_W0:_S_W0 + FRONT, 0:UNITS].set(wsh0_r)
    ws = ws.at[_S_R1A:_S_R1A + UNITS, 0:UNITS].set(p["sh_r1a"][0])
    ws = ws.at[_S_R1B:_S_R1B + UNITS, 0:UNITS].set(p["sh_r1b"][0])
    ws = ws.at[_S_R2A:_S_R2A + UNITS, 0:UNITS].set(p["sh_r2a"][0])
    ws = ws.at[_S_R2B:_S_R2B + UNITS, 0:UNITS].set(p["sh_r2b"][0])
    ws = ws.at[_S_WO:_S_WO + UNITS, 0:STATE_DIM].set(p["out"][0])
    ws = ws.at[_S_B0, 0:UNITS].set(p["sh0"][1])
    ws = ws.at[_S_B1A, 0:UNITS].set(p["sh_r1a"][1])
    ws = ws.at[_S_B1B, 0:UNITS].set(p["sh_r1b"][1])
    ws = ws.at[_S_B2A, 0:UNITS].set(p["sh_r2a"][1])
    ws = ws.at[_S_B2B, 0:UNITS].set(p["sh_r2b"][1])
    ws = ws.at[_S_BO, 0:STATE_DIM].set(p["out"][1])
    return wf, ws


# -------------------------------- wrapper -----------------------------------

def panda_forward(states_prev, observations, controls, packed,
                  use_prev_state=True, tile_n=2048):
    wf, ws = packed
    s = (states_prev if use_prev_state else jnp.zeros_like(states_prev)).astype(jnp.float32)
    c = controls.astype(jnp.float32)
    gp = observations["gripper_pose"].astype(jnp.float32)
    gs = observations["gripper_sensors"].astype(jnp.float32)

    # observations["image"] is intentionally not consumed: the torch forward multiplies
    # the image-branch features by 0, so (for finite conv outputs) its contribution is 0.
    # TODO(synk): production callers with tiny batches (N <~ few hundred) may prefer the
    # plain XLA dense path; the kernel pays off once the batch grid amortizes launch cost.

    n = s.shape[0]
    n8 = _round_up(max(n, 1), 8)
    if n8 <= tile_n:
        # A single tile would leave one v7x TensorCore idle; split batches >= 512 rows
        # into 2 grid steps (costs one extra ~0.35us step on 1-TC v5e/v6e, negligible).
        tile = n8 if n8 < 512 else _round_up(pl.cdiv(n8, 2), 8)
    else:
        tile = tile_n
    grid = (pl.cdiv(n, tile),)   # trailing partial block is handled (masked writeback)

    out = pl.pallas_call(
        panda_kernel,
        out_shape=jax.ShapeDtypeStruct((n, OUT_W), jnp.float32),
        grid=grid,
        in_specs=[
            pl.BlockSpec((tile, STATE_DIM), lambda i: (i, 0)),
            pl.BlockSpec((tile, CONTROL_DIM), lambda i: (i, 0)),
            pl.BlockSpec((tile, OBS_POSE_DIM), lambda i: (i, 0)),
            pl.BlockSpec((tile, OBS_SENSORS_DIM), lambda i: (i, 0)),
            pl.BlockSpec(wf.shape, lambda i: (0, 0)),
            pl.BlockSpec(ws.shape, lambda i: (0, 0)),
        ],
        out_specs=pl.BlockSpec((tile, OUT_W), lambda i: (i, 0)),
        compiler_params=pltpu.CompilerParams(
            dimension_semantics=("parallel",),
            vmem_limit_bytes=32 * 1024 * 1024),
    )(s, c, gp, gs, wf, ws)
    return out[:, :STATE_DIM]


# ------------------------- pure-JAX reference check -------------------------

def panda_reference(states_prev, observations, controls, p, use_prev_state=True):
    relu = lambda v: jnp.maximum(v, 0.0)
    lin = lambda x, wb: x @ wb[0] + wb[1]
    res = lambda x, a, b: x + relu(lin(relu(lin(x, a)), b))

    s = states_prev if use_prev_state else jnp.zeros_like(states_prev)
    state_f = res(relu(lin(s, p["state0"])), p["state_r1"], p["state_r2"])
    ctrl_f = res(relu(lin(controls, p["ctrl0"])), p["ctrl_r1"], p["ctrl_r2"])
    pose_f = res(lin(observations["gripper_pose"], p["pose0"]), p["pose_r1"], p["pose_r2"])
    sens_f = res(lin(observations["gripper_sensors"], p["sens0"]), p["sens_r1"], p["sens_r2"])
    img_f = jnp.zeros((s.shape[0], UNITS), jnp.float32)          # branch output * 0
    merged = jnp.concatenate([state_f, img_f, pose_f, sens_f, ctrl_f], axis=1)
    h = relu(lin(merged, p["sh0"]))
    h = res(h, p["sh_r1a"], p["sh_r1b"])
    h = res(h, p["sh_r2a"], p["sh_r2b"])
    return lin(h, p["out"])


# ---------------------------------- main -------------------------------------

if __name__ == "__main__":
    key = jax.random.PRNGKey(0)
    k_params, k_s, k_i, k_p, k_g, k_c = jax.random.split(key, 6)

    N = 8
    params = make_params(k_params)
    packed = pack_params(params)

    states_prev = jax.random.normal(k_s, (N, STATE_DIM), jnp.float32)
    observations = {
        "image": jax.random.normal(k_i, (N, IMG_H, IMG_W), jnp.float32),  # dead branch
        "gripper_pose": jax.random.normal(k_p, (N, OBS_POSE_DIM), jnp.float32),
        "gripper_sensors": jax.random.normal(k_g, (N, OBS_SENSORS_DIM), jnp.float32),
    }
    controls = jax.random.normal(k_c, (N, CONTROL_DIM), jnp.float32)

    out = panda_forward(states_prev, observations, controls, packed, use_prev_state=True)
    out = jax.block_until_ready(out)
    assert out.shape == (N, STATE_DIM) and out.dtype == jnp.float32

    ref = panda_reference(states_prev, observations, controls, params, use_prev_state=True)
    assert jnp.allclose(out, ref, rtol=1e-4, atol=1e-4), float(jnp.max(jnp.abs(out - ref)))
    print("KERNEL_OK")
</pallas_src>

<mosaic_0001>
module attributes {stable_mosaic.version = 11 : i64} {
  func.func @panda_kernel(%arg0: i32, %arg1: memref<8x2xf32, #tpu.memory_space<vmem>>, %arg2: memref<8x7xf32, #tpu.memory_space<vmem>>, %arg3: memref<8x7xf32, #tpu.memory_space<vmem>>, %arg4: memref<8x7xf32, #tpu.memory_space<vmem>>, %arg5: memref<232x96xf32, #tpu.memory_space<vmem>>, %arg6: memref<264x128xf32, #tpu.memory_space<vmem>>, %arg7: memref<8x128xf32, #tpu.memory_space<vmem>>) attributes {dimension_semantics = [#tpu.dimension_semantics<parallel>], iteration_bounds = array<i64: 1>, scalar_prefetch = 0 : i64, scratch_operands = 0 : i64, tpu.core_type = #tpu.core_type<tc>, window_params = [{transform_indices = @transform_0, window_bounds = array<i64: 8, 2>}, {transform_indices = @transform_1, window_bounds = array<i64: 8, 7>}, {transform_indices = @transform_2, window_bounds = array<i64: 8, 7>}, {transform_indices = @transform_3, window_bounds = array<i64: 8, 7>}, {pipeline_mode = #tpu.pipeline_mode<synchronous>, transform_indices = @transform_4, window_bounds = array<i64: 232, 96>}, {pipeline_mode = #tpu.pipeline_mode<synchronous>, transform_indices = @transform_5, window_bounds = array<i64: 264, 128>}, {transform_indices = @transform_6, window_bounds = array<i64: 8, 128>}]} {
    %c0 = arith.constant 0 : index
    %c0_0 = arith.constant 0 : index
    %0 = vector.load %arg1[%c0, %c0_0] : memref<8x2xf32, #tpu.memory_space<vmem>>, vector<8x2xf32>
    %c0_1 = arith.constant 0 : index
    %c0_2 = arith.constant 0 : index
    %1 = vector.load %arg5[%c0_1, %c0_2] : memref<232x96xf32, #tpu.memory_space<vmem>>, vector<2x96xf32>
    %cst = arith.constant dense<0.000000e+00> : vector<8x96xf32>
    %2 = tpu.matmul %0, %1, %cst {dimension_numbers = #tpu.dot_dimension_numbers<[1], [0], [0], [1], [0, 0, 1, 1], [], []>} : vector<8x2xf32>, vector<2x96xf32>, vector<8x96xf32> -> vector<8x96xf32>
    %c0_3 = arith.constant 0 : index
    %c0_4 = arith.constant 0 : index
    %3 = vector.load %arg2[%c0_3, %c0_4] : memref<8x7xf32, #tpu.memory_space<vmem>>, vector<8x7xf32>
    %c8 = arith.constant 8 : index
    %c0_5 = arith.constant 0 : index
    %4 = vector.load %arg5[%c8, %c0_5] : memref<232x96xf32, #tpu.memory_space<vmem>>, vector<7x96xf32>
    %cst_6 = arith.constant dense<0.000000e+00> : vector<8x96xf32>
    %5 = tpu.matmul %3, %4, %cst_6 {dimension_numbers = #tpu.dot_dimension_numbers<[1], [0], [0], [1], [0, 0, 1, 1], [], []>} : vector<8x7xf32>, vector<7x96xf32>, vector<8x96xf32> -> vector<8x96xf32>
    %6 = arith.addf %2, %5 : vector<8x96xf32>
    %c0_7 = arith.constant 0 : index
    %c0_8 = arith.constant 0 : index
    %7 = vector.load %arg3[%c0_7, %c0_8] : memref<8x7xf32, #tpu.memory_space<vmem>>, vector<8x7xf32>
    %c16 = arith.constant 16 : index
    %c0_9 = arith.constant 0 : index
    %8 = vector.load %arg5[%c16, %c0_9] : memref<232x96xf32, #tpu.memory_space<vmem>>, vector<7x96xf32>
    %cst_10 = arith.constant dense<0.000000e+00> : vector<8x96xf32>
    %9 = tpu.matmul %7, %8, %cst_10 {dimension_numbers = #tpu.dot_dimension_numbers<[1], [0], [0], [1], [0, 0, 1, 1], [], []>} : vector<8x7xf32>, vector<7x96xf32>, vector<8x96xf32> -> vector<8x96xf32>
    %10 = arith.addf %6, %9 : vector<8x96xf32>
    %c0_11 = arith.constant 0 : index
    %c0_12 = arith.constant 0 : index
    %11 = vector.load %arg4[%c0_11, %c0_12] : memref<8x7xf32, #tpu.memory_space<vmem>>, vector<8x7xf32>
    %c24 = arith.constant 24 : index
    %c0_13 = arith.constant 0 : index
    %12 = vector.load %arg5[%c24, %c0_13] : memref<232x96xf32, #tpu.memory_space<vmem>>, vector<7x96xf32>
    %cst_14 = arith.constant dense<0.000000e+00> : vector<8x96xf32>
    %13 = tpu.matmul %11, %12, %cst_14 {dimension_numbers = #tpu.dot_dimension_numbers<[1], [0], [0], [1], [0, 0, 1, 1], [], []>} : vector<8x7xf32>, vector<7x96xf32>, vector<8x96xf32> -> vector<8x96xf32>
    %14 = arith.addf %10, %13 : vector<8x96xf32>
    %c224 = arith.constant 224 : index
    %c0_15 = arith.constant 0 : index
    %15 = vector.load %arg5[%c224, %c0_15] : memref<232x96xf32, #tpu.memory_space<vmem>>, vector<1x96xf32>
    %16 = vector.broadcast %15 : vector<1x96xf32> to vector<8x96xf32>
    %17 = arith.addf %14, %16 : vector<8x96xf32>
    %c227 = arith.constant 227 : index
    %c0_16 = arith.constant 0 : index
    %18 = vector.load %arg5[%c227, %c0_16] : memref<232x96xf32, #tpu.memory_space<vmem>>, vector<1x96xf32>
    %cst_17 = arith.constant 0.000000e+00 : f32
    %19 = vector.broadcast %cst_17 : f32 to vector<8x96xf32>
    %20 = arith.minimumf %17, %19 : vector<8x96xf32>
    %21 = vector.broadcast %18 : vector<1x96xf32> to vector<8x96xf32>
    %22 = arith.mulf %21, %20 : vector<8x96xf32>
    %23 = arith.subf %17, %22 : vector<8x96xf32>
    %c32 = arith.constant 32 : index
    %c0_18 = arith.constant 0 : index
    %24 = vector.load %arg5[%c32, %c0_18] : memref<232x96xf32, #tpu.memory_space<vmem>>, vector<96x96xf32>
    %cst_19 = arith.constant dense<0.000000e+00> : vector<8x96xf32>
    %25 = tpu.matmul %23, %24, %cst_19 {dimension_numbers = #tpu.dot_dimension_numbers<[1], [0], [0], [1], [0, 0, 1, 1], [], []>} : vector<8x96xf32>, vector<96x96xf32>, vector<8x96xf32> -> vector<8x96xf32>
    %c225 = arith.constant 225 : index
    %c0_20 = arith.constant 0 : index
    %26 = vector.load %arg5[%c225, %c0_20] : memref<232x96xf32, #tpu.memory_space<vmem>>, vector<1x96xf32>
    %27 = vector.broadcast %26 : vector<1x96xf32> to vector<8x96xf32>
    %28 = arith.addf %25, %27 : vector<8x96xf32>
    %cst_21 = arith.constant 0.000000e+00 : f32
    %29 = vector.broadcast %cst_21 : f32 to vector<8x96xf32>
    %30 = arith.maximumf %28, %29 : vector<8x96xf32>
    %c128 = arith.constant 128 : index
    %c0_22 = arith.constant 0 : index
    %31 = vector.load %arg5[%c128, %c0_22] : memref<232x96xf32, #tpu.memory_space<vmem>>, vector<96x96xf32>
    %cst_23 = arith.constant dense<0.000000e+00> : vector<8x96xf32>
    %32 = tpu.matmul %30, %31, %cst_23 {dimension_numbers = #tpu.dot_dimension_numbers<[1], [0], [0], [1], [0, 0, 1, 1], [], []>} : vector<8x96xf32>, vector<96x96xf32>, vector<8x96xf32> -> vector<8x96xf32>
    %c226 = arith.constant 226 : index
    %c0_24 = arith.constant 0 : index
    %33 = vector.load %arg5[%c226, %c0_24] : memref<232x96xf32, #tpu.memory_space<vmem>>, vector<1x96xf32>
    %34 = vector.broadcast %33 : vector<1x96xf32> to vector<8x96xf32>
    %35 = arith.addf %32, %34 : vector<8x96xf32>
    %cst_25 = arith.constant 0.000000e+00 : f32
    %36 = vector.broadcast %cst_25 : f32 to vector<8x96xf32>
    %37 = arith.maximumf %35, %36 : vector<8x96xf32>
    %38 = arith.addf %23, %37 : vector<8x96xf32>
    %c0_26 = arith.constant 0 : index
    %c0_27 = arith.constant 0 : index
    %39 = vector.load %arg6[%c0_26, %c0_27] : memref<264x128xf32, #tpu.memory_space<vmem>>, vector<96x32xf32>
    %cst_28 = arith.constant dense<0.000000e+00> : vector<8x32xf32>
    %40 = tpu.matmul %38, %39, %cst_28 {dimension_numbers = #tpu.dot_dimension_numbers<[1], [0], [0], [1], [0, 0, 1, 1], [], []>} : vector<8x96xf32>, vector<96x32xf32>, vector<8x32xf32> -> vector<8x32xf32>
    %c256 = arith.constant 256 : index
    %c0_29 = arith.constant 0 : index
    %41 = vector.load %arg6[%c256, %c0_29] : memref<264x128xf32, #tpu.memory_space<vmem>>, vector<1x32xf32>
    %42 = vector.broadcast %41 : vector<1x32xf32> to vector<8x32xf32>
    %43 = arith.addf %40, %42 : vector<8x32xf32>
    %cst_30 = arith.constant 0.000000e+00 : f32
    %44 = vector.broadcast %cst_30 : f32 to vector<8x32xf32>
    %45 = arith.maximumf %43, %44 : vector<8x32xf32>
    %c96 = arith.constant 96 : index
    %c0_31 = arith.constant 0 : index
    %46 = vector.load %arg6[%c96, %c0_31] : memref<264x128xf32, #tpu.memory_space<vmem>>, vector<32x32xf32>
    %cst_32 = arith.constant dense<0.000000e+00> : vector<8x32xf32>
    %47 = tpu.matmul %45, %46, %cst_32 {dimension_numbers = #tpu.dot_dimension_numbers<[1], [0], [0], [1], [0, 0, 1, 1], [], []>} : vector<8x32xf32>, vector<32x32xf32>, vector<8x32xf32> -> vector<8x32xf32>
    %c257 = arith.constant 257 : index
    %c0_33 = arith.constant 0 : index
    %48 = vector.load %arg6[%c257, %c0_33] : memref<264x128xf32, #tpu.memory_space<vmem>>, vector<1x32xf32>
    %49 = vector.broadcast %48 : vector<1x32xf32> to vector<8x32xf32>
    %50 = arith.addf %47, %49 : vector<8x32xf32>
    %cst_34 = arith.constant 0.000000e+00 : f32
    %51 = vector.broadcast %cst_34 : f32 to vector<8x32xf32>
    %52 = arith.maximumf %50, %51 : vector<8x32xf32>
    %c128_35 = arith.constant 128 : index
    %c0_36 = arith.constant 0 : index
    %53 = vector.load %arg6[%c128_35, %c0_36] : memref<264x128xf32, #tpu.memory_space<vmem>>, vector<32x32xf32>
    %cst_37 = arith.constant dense<0.000000e+00> : vector<8x32xf32>
    %54 = tpu.matmul %52, %53, %cst_37 {dimension_numbers = #tpu.dot_dimension_numbers<[1], [0], [0], [1], [0, 0, 1, 1], [], []>} : vector<8x32xf32>, vector<32x32xf32>, vector<8x32xf32> -> vector<8x32xf32>
    %c258 = arith.constant 258 : index
    %c0_38 = arith.constant 0 : index
    %55 = vector.load %arg6[%c258, %c0_38] : memref<264x128xf32, #tpu.memory_space<vmem>>, vector<1x32xf32>
    %56 = vector.broadcast %55 : vector<1x32xf32> to vector<8x32xf32>
    %57 = arith.addf %54, %56 : vector<8x32xf32>
    %cst_39 = arith.constant 0.000000e+00 : f32
    %58 = vector.broadcast %cst_39 : f32 to vector<8x32xf32>
    %59 = arith.maximumf %57, %58 : vector<8x32xf32>
    %60 = arith.addf %45, %59 : vector<8x32xf32>
    %c160 = arith.constant 160 : index
    %c0_40 = arith.constant 0 : index
    %61 = vector.load %arg6[%c160, %c0_40] : memref<264x128xf32, #tpu.memory_space<vmem>>, vector<32x32xf32>
    %cst_41 = arith.constant dense<0.000000e+00> : vector<8x32xf32>
    %62 = tpu.matmul %60, %61, %cst_41 {dimension_numbers = #tpu.dot_dimension_numbers<[1], [0], [0], [1], [0, 0, 1, 1], [], []>} : vector<8x32xf32>, vector<32x32xf32>, vector<8x32xf32> -> vector<8x32xf32>
    %c259 = arith.constant 259 : index
    %c0_42 = arith.constant 0 : index
    %63 = vector.load %arg6[%c259, %c0_42] : memref<264x128xf32, #tpu.memory_space<vmem>>, vector<1x32xf32>
    %64 = vector.broadcast %63 : vector<1x32xf32> to vector<8x32xf32>
    %65 = arith.addf %62, %64 : vector<8x32xf32>
    %cst_43 = arith.constant 0.000000e+00 : f32
    %66 = vector.broadcast %cst_43 : f32 to vector<8x32xf32>
    %67 = arith.maximumf %65, %66 : vector<8x32xf32>
    %c192 = arith.constant 192 : index
    %c0_44 = arith.constant 0 : index
    %68 = vector.load %arg6[%c192, %c0_44] : memref<264x128xf32, #tpu.memory_space<vmem>>, vector<32x32xf32>
    %cst_45 = arith.constant dense<0.000000e+00> : vector<8x32xf32>
    %69 = tpu.matmul %67, %68, %cst_45 {dimension_numbers = #tpu.dot_dimension_numbers<[1], [0], [0], [1], [0, 0, 1, 1], [], []>} : vector<8x32xf32>, vector<32x32xf32>, vector<8x32xf32> -> vector<8x32xf32>
    %c260 = arith.constant 260 : index
    %c0_46 = arith.constant 0 : index
    %70 = vector.load %arg6[%c260, %c0_46] : memref<264x128xf32, #tpu.memory_space<vmem>>, vector<1x32xf32>
    %71 = vector.broadcast %70 : vector<1x32xf32> to vector<8x32xf32>
    %72 = arith.addf %69, %71 : vector<8x32xf32>
    %cst_47 = arith.constant 0.000000e+00 : f32
    %73 = vector.broadcast %cst_47 : f32 to vector<8x32xf32>
    %74 = arith.maximumf %72, %73 : vector<8x32xf32>
    %75 = arith.addf %60, %74 : vector<8x32xf32>
    %c224_48 = arith.constant 224 : index
    %c0_49 = arith.constant 0 : index
    %76 = vector.load %arg6[%c224_48, %c0_49] : memref<264x128xf32, #tpu.memory_space<vmem>>, vector<32x128xf32>
    %cst_50 = arith.constant dense<0.000000e+00> : vector<8x128xf32>
    %77 = tpu.matmul %75, %76, %cst_50 {dimension_numbers = #tpu.dot_dimension_numbers<[1], [0], [0], [1], [0, 0, 1, 1], [], []>} : vector<8x32xf32>, vector<32x128xf32>, vector<8x128xf32> -> vector<8x128xf32>
    %c261 = arith.constant 261 : index
    %c0_51 = arith.constant 0 : index
    %78 = vector.load %arg6[%c261, %c0_51] : memref<264x128xf32, #tpu.memory_space<vmem>>, vector<1x128xf32>
    %79 = vector.broadcast %78 : vector<1x128xf32> to vector<8x128xf32>
    %80 = arith.addf %77, %79 : vector<8x128xf32>
    %c0_52 = arith.constant 0 : index
    %c0_53 = arith.constant 0 : index
    %81 = vector.load %arg7[%c0_52, %c0_53] : memref<8x128xf32, #tpu.memory_space<vmem>>, vector<8x128xf32>
    tpu.vector_store %arg7[%c0_52, %c0_53], %80 {strides = array<i32>} : memref<8x128xf32, #tpu.memory_space<vmem>>, vector<8x128xf32>,
    return
  }
  func.func @transform_0(%arg0: i32) -> (i32, i32) {
    %c0_i32 = arith.constant 0 : i32
    %c0_i32_0 = arith.constant 0 : i32
    return %arg0, %c0_i32 : i32, i32
  }
  func.func @transform_1(%arg0: i32) -> (i32, i32) {
    %c0_i32 = arith.constant 0 : i32
    %c0_i32_0 = arith.constant 0 : i32
    return %arg0, %c0_i32 : i32, i32
  }
  func.func @transform_2(%arg0: i32) -> (i32, i32) {
    %c0_i32 = arith.constant 0 : i32
    %c0_i32_0 = arith.constant 0 : i32
    return %arg0, %c0_i32 : i32, i32
  }
  func.func @transform_3(%arg0: i32) -> (i32, i32) {
    %c0_i32 = arith.constant 0 : i32
    %c0_i32_0 = arith.constant 0 : i32
    return %arg0, %c0_i32 : i32, i32
  }
  func.func @transform_4(%arg0: i32) -> (i32, i32) {
    %c0_i32 = arith.constant 0 : i32
    %c0_i32_0 = arith.constant 0 : i32
    %c0_i32_1 = arith.constant 0 : i32
    return %c0_i32, %c0_i32_0 : i32, i32
  }
  func.func @transform_5(%arg0: i32) -> (i32, i32) {
    %c0_i32 = arith.constant 0 : i32
    %c0_i32_0 = arith.constant 0 : i32
    %c0_i32_1 = arith.constant 0 : i32
    return %c0_i32, %c0_i32_0 : i32, i32
  }
  func.func @transform_6(%arg0: i32) -> (i32, i32) {
    %c0_i32 = arith.constant 0 : i32
    %c0_i32_0 = arith.constant 0 : i32
    return %arg0, %c0_i32 : i32, i32
  }
}

</mosaic_0001>

<llo_original>
// kernel: tpu_custom_call.1
$region0: #{tpu_custom_call.1}
  #allocation0 [shape = 'u32[]', space=smem, size = 0x4, offset = 0x4, fixed_abs, tag = 'smem constant byte address 0x4 - core index']
  #allocation1 [shape = 'u32[144,128]{1,0:T(1,128)}', space=vmem, size = 0x12000, scoped, tag = 'internal scratch']
  %s0 = inlined_call_operand.vmem [shape: f32[8,2], index: 0, kind: input, shape index: {}]
  %s1 = inlined_call_operand.vmem [shape: f32[8,7], index: 1, kind: input, shape index: {}]
  %s2 = inlined_call_operand.vmem [shape: f32[8,7], index: 2, kind: input, shape index: {}]
  %s3 = inlined_call_operand.vmem [shape: f32[8,7], index: 3, kind: input, shape index: {}]
  %s4 = inlined_call_operand.vmem [shape: f32[232,96], index: 4, kind: input, shape index: {}]
  %s5 = inlined_call_operand.vmem [shape: f32[264,128], index: 5, kind: input, shape index: {}]
  %s6 = inlined_call_operand.hbm [shape: f32[8,128], index: 6, kind: output, shape index: {}]
  %s7 = sld [smem:[#allocation0]]
  $region34: #{tpu_custom_call.1} parent=0
    _
  %s9 = ssub.s32 1, %s7
  %s10 = scalar_select 0, %s9, %s7
  $region1: #{tpu_custom_call.1} parent=0
    #allocation2 [shape = 'u8[4096]{0}', space=vmem, size = 0x1000, scoped, tag = 'output window, operand 0, single buffered']
    #allocation3 [shape = 's32[1]{0}', space=sflag, size = 0x4, scoped, tag = 'scoped memory for tpu_custom_call.1']
    %11 = vsyncpa [#allocation3], 0
    // Predicated region
    $region2: #{tpu_custom_call.1} parent=1 // pred_check
      _
    $region3: #{tpu_custom_call.1} parent=1 // pred_check_branch
      %13 = sbr.rel (0) target = $region5
    $region4: #{tpu_custom_call.1} parent=1 // pred_region
      _
    $region5: #{tpu_custom_call.1} parent=1 // pred_fallthru
      _
    // Predicated region
    $region6: #{tpu_custom_call.1} parent=1 // pred_check
      _
    $region7: #{tpu_custom_call.1} parent=1 // pred_check_branch
      %15 = sbr.rel (0) target = $region9
    $region8: #{tpu_custom_call.1} parent=1 // pred_region
      _
    $region9: #{tpu_custom_call.1} parent=1 // pred_fallthru
      _
    // Predicated region
    $region10: #{tpu_custom_call.1} parent=1 // pred_check
      _
    $region11: #{tpu_custom_call.1} parent=1 // pred_check_branch
      %17 = sbr.rel (0) target = $region13
    $region12: #{tpu_custom_call.1} parent=1 // pred_region
      _
    $region13: #{tpu_custom_call.1} parent=1 // pred_fallthru
      _
    // Predicated region
    $region14: #{tpu_custom_call.1} parent=1 // pred_check
      _
    $region15: #{tpu_custom_call.1} parent=1 // pred_check_branch
      %19 = sbr.rel (0) target = $region17
    $region16: #{tpu_custom_call.1} parent=1 // pred_region
      _
    $region17: #{tpu_custom_call.1} parent=1 // pred_fallthru
      _
    // Predicated region
    $region18: #{tpu_custom_call.1} parent=1 // pred_check
      _
    $region19: #{tpu_custom_call.1} parent=1 // pred_check_branch
      %21 = sbr.rel (0) target = $region21
    $region20: #{tpu_custom_call.1} parent=1 // pred_region
      _
    $region21: #{tpu_custom_call.1} parent=1 // pred_fallthru
      _
    // Predicated region
    $region22: #{tpu_custom_call.1} parent=1 // pred_check
      _
    $region23: #{tpu_custom_call.1} parent=1 // pred_check_branch
      %23 = sbr.rel (0) target = $region25
    $region24: #{tpu_custom_call.1} parent=1 // pred_region
      _
    $region25: #{tpu_custom_call.1} parent=1 // pred_fallthru
      _
    %v24 = vld [vmem:[%s0] sm:$0xff]
    %v25 = vld [vmem:[%s4] sm:$0x3]
    %v26 = vld [vmem:[%s1] sm:$0xff]
    %v27 = vld [vmem:[%s4 + $0x8] sm:$0x7f]
    %vm28 = vcmask 56320
    %v30 = vsel %vm28, %v26, 0
    %vm32 = vcmask 1046528
    %v34 = vsel %vm32, %v27, 0
    %36 = vmatprep.subr.mxu0 0.0
    %37 = vmatpush1.msra.mxu0 0.0
    %38 = vmatprep.subr.mxu0 0.0
    %39 = vmatpush1.msra.mxu0 0.0
    %40 = vmatprep.subr.mxu0 0.0
    %41 = vmatpush1.msra.mxu0 0.0
    %42 = vmatprep.subr.mxu0 0.0
    %43 = vmatpush1.msra.mxu0 0.0
    %44 = vmatprep.subr.mxu0 0.0
    %45 = vmatpush1.msra.mxu0 0.0
    %46 = vmatprep.subr.mxu0 0.0
    %47 = vmatpush1.msra.mxu0 0.0
    %48 = vmatprep.subr.mxu0 0.0
    %49 = vmatpush1.msra.mxu0 0.0
    %50 = vmatprep.subr.mxu0 0.0
    %51 = vmatpush1.msra.mxu0 0.0
    %52 = vmatprep.subr.mxu0 0.0
    %53 = vmatpush1.msra.mxu0 0.0
    %54 = vmatprep.subr.mxu0 0.0
    %55 = vmatpush1.msra.mxu0 0.0
    %56 = vmatprep.subr.mxu0 0.0
    %57 = vmatpush1.msra.mxu0 0.0
    %58 = vmatprep.subr.mxu0 0.0
    %59 = vmatpush1.msra.mxu0 0.0
    %60 = vmatprep.subr.mxu0 0.0
    %61 = vmatpush1.msra.mxu0 0.0
    %62 = vmatprep.subr.mxu0 0.0
    %63 = vmatpush1.msra.mxu0 0.0
    %64 = vmatprep.subr.mxu0 0.0
    %65 = vmatpush1.msra.mxu0 0.0
    %66 = vmatprep.subr.mxu0 0.0
    %67 = vmatpush1.msra.mxu0 %v34
    %68 = vmatprep.subr.mxu0 0.0
    %69 = vmatpush2.msra.mxu0 0.0
    %70 = vmatprep.subr.mxu0 0.0
    %71 = vmatpush2.msra.mxu0 0.0
    %72 = vmatprep.subr.mxu0 0.0
    %73 = vmatpush2.msra.mxu0 0.0
    %74 = vmatprep.subr.mxu0 0.0
    %75 = vmatpush2.msra.mxu0 0.0
    %76 = vmatprep.subr.mxu0 0.0
    %77 = vmatpush2.msra.mxu0 0.0
    %78 = vmatprep.subr.mxu0 0.0
    %79 = vmatpush2.msra.mxu0 0.0
    %80 = vmatprep.subr.mxu0 0.0
    %81 = vmatpush2.msra.mxu0 0.0
    %82 = vmatprep.subr.mxu0 0.0
    %83 = vmatpush2.msra.mxu0 0.0
    %84 = vmatprep.subr.mxu0 0.0
    %85 = vmatpush2.msra.mxu0 0.0
    %86 = vmatprep.subr.mxu0 0.0
    %87 = vmatpush2.msra.mxu0 0.0
    %88 = vmatprep.subr.mxu0 0.0
    %89 = vmatpush2.msra.mxu0 0.0
    %90 = vmatprep.subr.mxu0 0.0
    %91 = vmatpush2.msra.mxu0 0.0
    %92 = vmatprep.subr.mxu0 0.0
    %93 = vmatpush2.msra.mxu0 0.0
    %94 = vmatprep.subr.mxu0 0.0
    %95 = vmatpush2.msra.mxu0 0.0
    %96 = vmatprep.subr.mxu0 0.0
    %97 = vmatpush2.msra.mxu0 0.0
    %98 = vmatprep.subr.mxu0 0.0
    %99 = vmatpush2.msra.mxu0 0.0
    %100 = vmatprep.mubr.f32.mxu0 0.0
    %101 = vmatmul.mubr.f32.gmra.mxu0 %v30
    %v102 = vpop.f32.mrf.mxu0
    %v103 = vadd.f32 0.0, %v102
    %v104 = vpop.f32.mrf.mxu0
    %105 = vdwg.mxu0
    %vm106 = vcmask 15360
    %v108 = vsel %vm106, %v24, 0
    %vm110 = vcmask 1041408
    %v112 = vsel %vm110, %v25, 0
    %114 = vmatprep.subr.mxu0 0.0
    %115 = vmatpush1.msra.mxu0 0.0
    %116 = vmatprep.subr.mxu0 0.0
    %117 = vmatpush1.msra.mxu0 0.0
    %118 = vmatprep.subr.mxu0 0.0
    %119 = vmatpush1.msra.mxu0 0.0
    %120 = vmatprep.subr.mxu0 0.0
    %121 = vmatpush1.msra.mxu0 0.0
    %122 = vmatprep.subr.mxu0 0.0
    %123 = vmatpush1.msra.mxu0 0.0
    %124 = vmatprep.subr.mxu0 0.0
    %125 = vmatpush1.msra.mxu0 0.0
    %126 = vmatprep.subr.mxu0 0.0
    %127 = vmatpush1.msra.mxu0 0.0
    %128 = vmatprep.subr.mxu0 0.0
    %129 = vmatpush1.msra.mxu0 0.0
    %130 = vmatprep.subr.mxu0 0.0
    %131 = vmatpush1.msra.mxu0 0.0
    %132 = vmatprep.subr.mxu0 0.0
    %133 = vmatpush1.msra.mxu0 0.0
    %134 = vmatprep.subr.mxu0 0.0
    %135 = vmatpush1.msra.mxu0 0.0
    %136 = vmatprep.subr.mxu0 0.0
    %137 = vmatpush1.msra.mxu0 0.0
    %138 = vmatprep.subr.mxu0 0.0
    %139 = vmatpush1.msra.mxu0 0.0
    %140 = vmatprep.subr.mxu0 0.0
    %141 = vmatpush1.msra.mxu0 0.0
    %142 = vmatprep.subr.mxu0 0.0
    %143 = vmatpush1.msra.mxu0 0.0
    %144 = vmatprep.subr.mxu0 0.0
    %145 = vmatpush1.msra.mxu0 %v112
    %146 = vmatprep.subr.mxu0 0.0
    %147 = vmatpush2.msra.mxu0 0.0
    %148 = vmatprep.subr.mxu0 0.0
    %149 = vmatpush2.msra.mxu0 0.0
    %150 = vmatprep.subr.mxu0 0.0
    %151 = vmatpush2.msra.mxu0 0.0
    %152 = vmatprep.subr.mxu0 0.0
    %153 = vmatpush2.msra.mxu0 0.0
    %154 = vmatprep.subr.mxu0 0.0
    %155 = vmatpush2.msra.mxu0 0.0
    %156 = vmatprep.subr.mxu0 0.0
    %157 = vmatpush2.msra.mxu0 0.0
    %158 = vmatprep.subr.mxu0 0.0
    %159 = vmatpush2.msra.mxu0 0.0
    %160 = vmatprep.subr.mxu0 0.0
    %161 = vmatpush2.msra.mxu0 0.0
    %162 = vmatprep.subr.mxu0 0.0
    %163 = vmatpush2.msra.mxu0 0.0
    %164 = vmatprep.subr.mxu0 0.0
    %165 = vmatpush2.msra.mxu0 0.0
    %166 = vmatprep.subr.mxu0 0.0
    %167 = vmatpush2.msra.mxu0 0.0
    %168 = vmatprep.subr.mxu0 0.0
    %169 = vmatpush2.msra.mxu0 0.0
    %170 = vmatprep.subr.mxu0 0.0
    %171 = vmatpush2.msra.mxu0 0.0
    %172 = vmatprep.subr.mxu0 0.0
    %173 = vmatpush2.msra.mxu0 0.0
    %174 = vmatprep.subr.mxu0 0.0
    %175 = vmatpush2.msra.mxu0 0.0
    %176 = vmatprep.subr.mxu0 0.0
    %177 = vmatpush2.msra.mxu0 0.0
    %178 = vmatprep.mubr.f32.mxu0 0.0
    %179 = vmatmul.mubr.f32.gmra.mxu0 %v108
    %v180 = vpop.f32.mrf.mxu0
    %v181 = vadd.f32 %v103, %v180
    %v182 = vpop.f32.mrf.mxu0
    %183 = vdwg.mxu0
    %v184 = vld [vmem:[%s2] sm:$0xff]
    %v185 = vld [vmem:[%s4 + $0x10] sm:$0x7f]
    %v187 = vsel %vm28, %v184, 0
    %v190 = vsel %vm32, %v185, 0
    %192 = vmatprep.subr.mxu0 0.0
    %193 = vmatpush1.msra.mxu0 0.0
    %194 = vmatprep.subr.mxu0 0.0
    %195 = vmatpush1.msra.mxu0 0.0
    %196 = vmatprep.subr.mxu0 0.0
    %197 = vmatpush1.msra.mxu0 0.0
    %198 = vmatprep.subr.mxu0 0.0
    %199 = vmatpush1.msra.mxu0 0.0
    %200 = vmatprep.subr.mxu0 0.0
    %201 = vmatpush1.msra.mxu0 0.0
    %202 = vmatprep.subr.mxu0 0.0
    %203 = vmatpush1.msra.mxu0 0.0
    %204 = vmatprep.subr.mxu0 0.0
    %205 = vmatpush1.msra.mxu0 0.0
    %206 = vmatprep.subr.mxu0 0.0
    %207 = vmatpush1.msra.mxu0 0.0
    %208 = vmatprep.subr.mxu0 0.0
    %209 = vmatpush1.msra.mxu0 0.0
    %210 = vmatprep.subr.mxu0 0.0
    %211 = vmatpush1.msra.mxu0 0.0
    %212 = vmatprep.subr.mxu0 0.0
    %213 = vmatpush1.msra.mxu0 0.0
    %214 = vmatprep.subr.mxu0 0.0
    %215 = vmatpush1.msra.mxu0 0.0
    %216 = vmatprep.subr.mxu0 0.0
    %217 = vmatpush1.msra.mxu0 0.0
    %218 = vmatprep.subr.mxu0 0.0
    %219 = vmatpush1.msra.mxu0 0.0
    %220 = vmatprep.subr.mxu0 0.0
    %221 = vmatpush1.msra.mxu0 0.0
    %222 = vmatprep.subr.mxu0 0.0
    %223 = vmatpush1.msra.mxu0 %v190
    %224 = vmatprep.subr.mxu0 0.0
    %225 = vmatpush2.msra.mxu0 0.0
    %226 = vmatprep.subr.mxu0 0.0
    %227 = vmatpush2.msra.mxu0 0.0
    %228 = vmatprep.subr.mxu0 0.0
    %229 = vmatpush2.msra.mxu0 0.0
    %230 = vmatprep.subr.mxu0 0.0
    %231 = vmatpush2.msra.mxu0 0.0
    %232 = vmatprep.subr.mxu0 0.0
    %233 = vmatpush2.msra.mxu0 0.0
    %234 = vmatprep.subr.mxu0 0.0
    %235 = vmatpush2.msra.mxu0 0.0
    %236 = vmatprep.subr.mxu0 0.0
    %237 = vmatpush2.msra.mxu0 0.0
    %238 = vmatprep.subr.mxu0 0.0
    %239 = vmatpush2.msra.mxu0 0.0
    %240 = vmatprep.subr.mxu0 0.0
    %241 = vmatpush2.msra.mxu0 0.0
    %242 = vmatprep.subr.mxu0 0.0
    %243 = vmatpush2.msra.mxu0 0.0
    %244 = vmatprep.subr.mxu0 0.0
    %245 = vmatpush2.msra.mxu0 0.0
    %246 = vmatprep.subr.mxu0 0.0
    %247 = vmatpush2.msra.mxu0 0.0
    %248 = vmatprep.subr.mxu0 0.0
    %249 = vmatpush2.msra.mxu0 0.0
    %250 = vmatprep.subr.mxu0 0.0
    %251 = vmatpush2.msra.mxu0 0.0
    %252 = vmatprep.subr.mxu0 0.0
    %253 = vmatpush2.msra.mxu0 0.0
    %254 = vmatprep.subr.mxu0 0.0
    %255 = vmatpush2.msra.mxu0 0.0
    %256 = vmatprep.mubr.f32.mxu0 0.0
    %257 = vmatmul.mubr.f32.gmra.mxu0 %v187
    %v258 = vpop.f32.mrf.mxu0
    %v259 = vadd.f32 0.0, %v258
    %v260 = vpop.f32.mrf.mxu0
    %261 = vdwg.mxu0
    %v262 = vadd.f32 %v181, %v259
    %v263 = vld [vmem:[%s3] sm:$0xff]
    %v264 = vld [vmem:[%s4 + $0x18] sm:$0x7f]
    %v266 = vsel %vm28, %v263, 0
    %v269 = vsel %vm32, %v264, 0
    %271 = vmatprep.subr.mxu0 0.0
    %272 = vmatpush1.msra.mxu0 0.0
    %273 = vmatprep.subr.mxu0 0.0
    %274 = vmatpush1.msra.mxu0 0.0
    %275 = vmatprep.subr.mxu0 0.0
    %276 = vmatpush1.msra.mxu0 0.0
    %277 = vmatprep.subr.mxu0 0.0
    %278 = vmatpush1.msra.mxu0 0.0
    %279 = vmatprep.subr.mxu0 0.0
    %280 = vmatpush1.msra.mxu0 0.0
    %281 = vmatprep.subr.mxu0 0.0
    %282 = vmatpush1.msra.mxu0 0.0
    %283 = vmatprep.subr.mxu0 0.0
    %284 = vmatpush1.msra.mxu0 0.0
    %285 = vmatprep.subr.mxu0 0.0
    %286 = vmatpush1.msra.mxu0 0.0
    %287 = vmatprep.subr.mxu0 0.0
    %288 = vmatpush1.msra.mxu0 0.0
    %289 = vmatprep.subr.mxu0 0.0
    %290 = vmatpush1.msra.mxu0 0.0
    %291 = vmatprep.subr.mxu0 0.0
    %292 = vmatpush1.msra.mxu0 0.0
    %293 = vmatprep.subr.mxu0 0.0
    %294 = vmatpush1.msra.mxu0 0.0
    %295 = vmatprep.subr.mxu0 0.0
    %296 = vmatpush1.msra.mxu0 0.0
    %297 = vmatprep.subr.mxu0 0.0
    %298 = vmatpush1.msra.mxu0 0.0
    %299 = vmatprep.subr.mxu0 0.0
    %300 = vmatpush1.msra.mxu0 0.0
    %301 = vmatprep.subr.mxu0 0.0
    %302 = vmatpush1.msra.mxu0 %v269
    %303 = vmatprep.subr.mxu0 0.0
    %304 = vmatpush2.msra.mxu0 0.0
    %305 = vmatprep.subr.mxu0 0.0
    %306 = vmatpush2.msra.mxu0 0.0
    %307 = vmatprep.subr.mxu0 0.0
    %308 = vmatpush2.msra.mxu0 0.0
    %309 = vmatprep.subr.mxu0 0.0
    %310 = vmatpush2.msra.mxu0 0.0
    %311 = vmatprep.subr.mxu0 0.0
    %312 = vmatpush2.msra.mxu0 0.0
    %313 = vmatprep.subr.mxu0 0.0
    %314 = vmatpush2.msra.mxu0 0.0
    %315 = vmatprep.subr.mxu0 0.0
    %316 = vmatpush2.msra.mxu0 0.0
    %317 = vmatprep.subr.mxu0 0.0
    %318 = vmatpush2.msra.mxu0 0.0
    %319 = vmatprep.subr.mxu0 0.0
    %320 = vmatpush2.msra.mxu0 0.0
    %321 = vmatprep.subr.mxu0 0.0
    %322 = vmatpush2.msra.mxu0 0.0
    %323 = vmatprep.subr.mxu0 0.0
    %324 = vmatpush2.msra.mxu0 0.0
    %325 = vmatprep.subr.mxu0 0.0
    %326 = vmatpush2.msra.mxu0 0.0
    %327 = vmatprep.subr.mxu0 0.0
    %328 = vmatpush2.msra.mxu0 0.0
    %329 = vmatprep.subr.mxu0 0.0
    %330 = vmatpush2.msra.mxu0 0.0
    %331 = vmatprep.subr.mxu0 0.0
    %332 = vmatpush2.msra.mxu0 0.0
    %333 = vmatprep.subr.mxu0 0.0
    %334 = vmatpush2.msra.mxu0 0.0
    %335 = vmatprep.mubr.f32.mxu0 0.0
    %336 = vmatmul.mubr.f32.gmra.mxu0 %v266
    %v337 = vpop.f32.mrf.mxu0
    %v338 = vadd.f32 0.0, %v337
    %v339 = vpop.f32.mrf.mxu0
    %340 = vdwg.mxu0
    %v341 = vadd.f32 %v262, %v338
    %v342 = vld [vmem:[%s4 + $0xe0] sm:$0x1]
    %v343 = vlaneseq
    %v344 = vshrl.u32 %v343, 7
    %v345 = vsub.s32 0, %v344
    %v346 = vrot.slane %v342, %v345
    %v347 = vadd.f32 %v341, %v346
    %v348 = vld [vmem:[%s4 + $0xe3] sm:$0x1]
    %v349 = vmin.f32 %v347, 0.0
    %v350 = vlaneseq
    %v351 = vshrl.u32 %v350, 7
    %v352 = vsub.s32 0, %v351
    %v353 = vrot.slane %v348, %v352
    %v354 = vmul.f32 %v353, %v349
    %v355 = vsub.f32 %v347, %v354
    %v356 = vld [vmem:[%s4 + $0x20] sm:$0xff]
    %v357 = vld [vmem:[%s4 + $0x28] sm:$0xff]
    %v358 = vld [vmem:[%s4 + $0x30] sm:$0xff]
    %v359 = vld [vmem:[%s4 + $0x38] sm:$0xff]
    %v360 = vld [vmem:[%s4 + $0x40] sm:$0xff]
    %v361 = vld [vmem:[%s4 + $0x48] sm:$0xff]
    %v362 = vld [vmem:[%s4 + $0x50] sm:$0xff]
    %v363 = vld [vmem:[%s4 + $0x58] sm:$0xff]
    %v364 = vld [vmem:[%s4 + $0x60] sm:$0xff]
    %v365 = vld [vmem:[%s4 + $0x68] sm:$0xff]
    %v366 = vld [vmem:[%s4 + $0x70] sm:$0xff]
    %v367 = vld [vmem:[%s4 + $0x78] sm:$0xff]
    %v368 = vld [vmem:[%s4 + $0xe1] sm:$0x1]
    %v369 = vlaneseq
    %v370 = vshrl.u32 %v369, 7
    %v371 = vsub.s32 0, %v370
    %v372 = vrot.slane %v368, %v371
    %vm373 = vcmask 785408
    %v375 = vsel %vm373, %v355, 0
    %377 = vmatprep.subr.mxu0 0.0
    %378 = vmatpush1.msra.mxu0 0.0
    %379 = vmatprep.subr.mxu0 0.0
    %380 = vmatpush1.msra.mxu0 0.0
    %381 = vmatprep.subr.mxu0 0.0
    %382 = vmatpush1.msra.mxu0 0.0
    %383 = vmatprep.subr.mxu0 0.0
    %384 = vmatpush1.msra.mxu0 0.0
    %385 = vmatprep.subr.mxu0 0.0
    %386 = vmatpush1.msra.mxu0 %v367
    %387 = vmatprep.subr.mxu0 0.0
    %388 = vmatpush1.msra.mxu0 %v366
    %389 = vmatprep.subr.mxu0 0.0
    %390 = vmatpush1.msra.mxu0 %v365
    %391 = vmatprep.subr.mxu0 0.0
    %392 = vmatpush1.msra.mxu0 %v364
    %393 = vmatprep.subr.mxu0 0.0
    %394 = vmatpush1.msra.mxu0 %v363
    %395 = vmatprep.subr.mxu0 0.0
    %396 = vmatpush1.msra.mxu0 %v362
    %397 = vmatprep.subr.mxu0 0.0
    %398 = vmatpush1.msra.mxu0 %v361
    %399 = vmatprep.subr.mxu0 0.0
    %400 = vmatpush1.msra.mxu0 %v360
    %401 = vmatprep.subr.mxu0 0.0
    %402 = vmatpush1.msra.mxu0 %v359
    %403 = vmatprep.subr.mxu0 0.0
    %404 = vmatpush1.msra.mxu0 %v358
    %405 = vmatprep.subr.mxu0 0.0
    %406 = vmatpush1.msra.mxu0 %v357
    %407 = vmatprep.subr.mxu0 0.0
    %408 = vmatpush1.msra.mxu0 %v356
    %409 = vmatprep.subr.mxu0 0.0
    %410 = vmatpush2.msra.mxu0 0.0
    %411 = vmatprep.subr.mxu0 0.0
    %412 = vmatpush2.msra.mxu0 0.0
    %413 = vmatprep.subr.mxu0 0.0
    %414 = vmatpush2.msra.mxu0 0.0
    %415 = vmatprep.subr.mxu0 0.0
    %416 = vmatpush2.msra.mxu0 0.0
    %417 = vmatprep.subr.mxu0 0.0
    %418 = vmatpush2.msra.mxu0 0.0
    %419 = vmatprep.subr.mxu0 0.0
    %420 = vmatpush2.msra.mxu0 0.0
    %421 = vmatprep.subr.mxu0 0.0
    %422 = vmatpush2.msra.mxu0 0.0
    %423 = vmatprep.subr.mxu0 0.0
    %424 = vmatpush2.msra.mxu0 0.0
    %425 = vmatprep.subr.mxu0 0.0
    %426 = vmatpush2.msra.mxu0 0.0
    %427 = vmatprep.subr.mxu0 0.0
    %428 = vmatpush2.msra.mxu0 0.0
    %429 = vmatprep.subr.mxu0 0.0
    %430 = vmatpush2.msra.mxu0 0.0
    %431 = vmatprep.subr.mxu0 0.0
    %432 = vmatpush2.msra.mxu0 0.0
    %433 = vmatprep.subr.mxu0 0.0
    %434 = vmatpush2.msra.mxu0 0.0
    %435 = vmatprep.subr.mxu0 0.0
    %436 = vmatpush2.msra.mxu0 0.0
    %437 = vmatprep.subr.mxu0 0.0
    %438 = vmatpush2.msra.mxu0 0.0
    %439 = vmatprep.subr.mxu0 0.0
    %440 = vmatpush2.msra.mxu0 0.0
    %441 = vmatprep.mubr.f32.mxu0 0.0
    %442 = vmatmul.mubr.f32.gmra.mxu0 %v375
    %v443 = vpop.f32.mrf.mxu0
    %v444 = vadd.f32 %v372, %v443
    %v445 = vpop.f32.mrf.mxu0
    %446 = vdwg.mxu0
    %v447 = vmax.f32 %v444, 0.0
    %v448 = vld [vmem:[%s4 + $0x80] sm:$0xff]
    %v449 = vld [vmem:[%s4 + $0x88] sm:$0xff]
    %v450 = vld [vmem:[%s4 + $0x90] sm:$0xff]
    %v451 = vld [vmem:[%s4 + $0x98] sm:$0xff]
    %v452 = vld [vmem:[%s4 + $0xa0] sm:$0xff]
    %v453 = vld [vmem:[%s4 + $0xa8] sm:$0xff]
    %v454 = vld [vmem:[%s4 + $0xb0] sm:$0xff]
    %v455 = vld [vmem:[%s4 + $0xb8] sm:$0xff]
    %v456 = vld [vmem:[%s4 + $0xc0] sm:$0xff]
    %v457 = vld [vmem:[%s4 + $0xc8] sm:$0xff]
    %v458 = vld [vmem:[%s4 + $0xd0] sm:$0xff]
    %v459 = vld [vmem:[%s4 + $0xd8] sm:$0xff]
    %v460 = vld [vmem:[%s4 + $0xe2] sm:$0x1]
    %v461 = vlaneseq
    %v462 = vshrl.u32 %v461, 7
    %v463 = vsub.s32 0, %v462
    %v464 = vrot.slane %v460, %v463
    %v466 = vsel %vm373, %v447, 0
    %468 = vmatprep.subr.mxu0 0.0
    %469 = vmatpush1.msra.mxu0 0.0
    %470 = vmatprep.subr.mxu0 0.0
    %471 = vmatpush1.msra.mxu0 0.0
    %472 = vmatprep.subr.mxu0 0.0
    %473 = vmatpush1.msra.mxu0 0.0
    %474 = vmatprep.subr.mxu0 0.0
    %475 = vmatpush1.msra.mxu0 0.0
    %476 = vmatprep.subr.mxu0 0.0
    %477 = vmatpush1.msra.mxu0 %v459
    %478 = vmatprep.subr.mxu0 0.0
    %479 = vmatpush1.msra.mxu0 %v458
    %480 = vmatprep.subr.mxu0 0.0
    %481 = vmatpush1.msra.mxu0 %v457
    %482 = vmatprep.subr.mxu0 0.0
    %483 = vmatpush1.msra.mxu0 %v456
    %484 = vmatprep.subr.mxu0 0.0
    %485 = vmatpush1.msra.mxu0 %v455
    %486 = vmatprep.subr.mxu0 0.0
    %487 = vmatpush1.msra.mxu0 %v454
    %488 = vmatprep.subr.mxu0 0.0
    %489 = vmatpush1.msra.mxu0 %v453
    %490 = vmatprep.subr.mxu0 0.0
    %491 = vmatpush1.msra.mxu0 %v452
    %492 = vmatprep.subr.mxu0 0.0
    %493 = vmatpush1.msra.mxu0 %v451
    %494 = vmatprep.subr.mxu0 0.0
    %495 = vmatpush1.msra.mxu0 %v450
    %496 = vmatprep.subr.mxu0 0.0
    %497 = vmatpush1.msra.mxu0 %v449
    %498 = vmatprep.subr.mxu0 0.0
    %499 = vmatpush1.msra.mxu0 %v448
    %500 = vmatprep.subr.mxu0 0.0
    %501 = vmatpush2.msra.mxu0 0.0
    %502 = vmatprep.subr.mxu0 0.0
    %503 = vmatpush2.msra.mxu0 0.0
    %504 = vmatprep.subr.mxu0 0.0
    %505 = vmatpush2.msra.mxu0 0.0
    %506 = vmatprep.subr.mxu0 0.0
    %507 = vmatpush2.msra.mxu0 0.0
    %508 = vmatprep.subr.mxu0 0.0
    %509 = vmatpush2.msra.mxu0 0.0
    %510 = vmatprep.subr.mxu0 0.0
    %511 = vmatpush2.msra.mxu0 0.0
    %512 = vmatprep.subr.mxu0 0.0
    %513 = vmatpush2.msra.mxu0 0.0
    %514 = vmatprep.subr.mxu0 0.0
    %515 = vmatpush2.msra.mxu0 0.0
    %516 = vmatprep.subr.mxu0 0.0
    %517 = vmatpush2.msra.mxu0 0.0
    %518 = vmatprep.subr.mxu0 0.0
    %519 = vmatpush2.msra.mxu0 0.0
    %520 = vmatprep.subr.mxu0 0.0
    %521 = vmatpush2.msra.mxu0 0.0
    %522 = vmatprep.subr.mxu0 0.0
    %523 = vmatpush2.msra.mxu0 0.0
    %524 = vmatprep.subr.mxu0 0.0
    %525 = vmatpush2.msra.mxu0 0.0
    %526 = vmatprep.subr.mxu0 0.0
    %527 = vmatpush2.msra.mxu0 0.0
    %528 = vmatprep.subr.mxu0 0.0
    %529 = vmatpush2.msra.mxu0 0.0
    %530 = vmatprep.subr.mxu0 0.0
    %531 = vmatpush2.msra.mxu0 0.0
    %532 = vmatprep.mubr.f32.mxu0 0.0
    %533 = vmatmul.mubr.f32.gmra.mxu0 %v466
    %v534 = vpop.f32.mrf.mxu0
    %v535 = vadd.f32 %v464, %v534
    %v536 = vpop.f32.mrf.mxu0
    %537 = vdwg.mxu0
    %v538 = vmax.f32 %v535, 0.0
    %v539 = vadd.f32 %v355, %v538
    %v540 = vld [vmem:[%s5] sm:$0xff]
    %v541 = vld [vmem:[%s5 + $0x8] sm:$0xff]
    %v542 = vld [vmem:[%s5 + $0x10] sm:$0xff]
    %v543 = vld [vmem:[%s5 + $0x18] sm:$0xff]
    %v544 = vld [vmem:[%s5 + $0x20] sm:$0xff]
    %v545 = vld [vmem:[%s5 + $0x28] sm:$0xff]
    %v546 = vld [vmem:[%s5 + $0x30] sm:$0xff]
    %v547 = vld [vmem:[%s5 + $0x38] sm:$0xff]
    %v548 = vld [vmem:[%s5 + $0x40] sm:$0xff]
    %v549 = vld [vmem:[%s5 + $0x48] sm:$0xff]
    %v550 = vld [vmem:[%s5 + $0x50] sm:$0xff]
    %v551 = vld [vmem:[%s5 + $0x58] sm:$0xff]
    %v552 = vld [vmem:[%s5 + $0x100] sm:$0x1]
    %v553 = vlaneseq
    %v554 = vshrl.u32 %v553, 7
    %v555 = vsub.s32 0, %v554
    %v556 = vrot.slane %v552, %v555
    %v558 = vsel %vm373, %v539, 0
    %560 = vmatprep.subr.mxu0 0.0
    %561 = vmatpush1.msra.mxu0 0.0
    %562 = vmatprep.subr.mxu0 0.0
    %563 = vmatpush1.msra.mxu0 0.0
    %564 = vmatprep.subr.mxu0 0.0
    %565 = vmatpush1.msra.mxu0 0.0
    %566 = vmatprep.subr.mxu0 0.0
    %567 = vmatpush1.msra.mxu0 0.0
    %568 = vmatprep.subr.mxu0 0.0
    %569 = vmatpush1.msra.mxu0 %v551
    %570 = vmatprep.subr.mxu0 0.0
    %571 = vmatpush1.msra.mxu0 %v550
    %572 = vmatprep.subr.mxu0 0.0
    %573 = vmatpush1.msra.mxu0 %v549
    %574 = vmatprep.subr.mxu0 0.0
    %575 = vmatpush1.msra.mxu0 %v548
    %576 = vmatprep.subr.mxu0 0.0
    %577 = vmatpush1.msra.mxu0 %v547
    %578 = vmatprep.subr.mxu0 0.0
    %579 = vmatpush1.msra.mxu0 %v546
    %580 = vmatprep.subr.mxu0 0.0
    %581 = vmatpush1.msra.mxu0 %v545
    %582 = vmatprep.subr.mxu0 0.0
    %583 = vmatpush1.msra.mxu0 %v544
    %584 = vmatprep.subr.mxu0 0.0
    %585 = vmatpush1.msra.mxu0 %v543
    %586 = vmatprep.subr.mxu0 0.0
    %587 = vmatpush1.msra.mxu0 %v542
    %588 = vmatprep.subr.mxu0 0.0
    %589 = vmatpush1.msra.mxu0 %v541
    %590 = vmatprep.subr.mxu0 0.0
    %591 = vmatpush1.msra.mxu0 %v540
    %592 = vmatprep.subr.mxu0 0.0
    %593 = vmatpush2.msra.mxu0 0.0
    %594 = vmatprep.subr.mxu0 0.0
    %595 = vmatpush2.msra.mxu0 0.0
    %596 = vmatprep.subr.mxu0 0.0
    %597 = vmatpush2.msra.mxu0 0.0
    %598 = vmatprep.subr.mxu0 0.0
    %599 = vmatpush2.msra.mxu0 0.0
    %600 = vmatprep.subr.mxu0 0.0
    %601 = vmatpush2.msra.mxu0 0.0
    %602 = vmatprep.subr.mxu0 0.0
    %603 = vmatpush2.msra.mxu0 0.0
    %604 = vmatprep.subr.mxu0 0.0
    %605 = vmatpush2.msra.mxu0 0.0
    %606 = vmatprep.subr.mxu0 0.0
    %607 = vmatpush2.msra.mxu0 0.0
    %608 = vmatprep.subr.mxu0 0.0
    %609 = vmatpush2.msra.mxu0 0.0
    %610 = vmatprep.subr.mxu0 0.0
    %611 = vmatpush2.msra.mxu0 0.0
    %612 = vmatprep.subr.mxu0 0.0
    %613 = vmatpush2.msra.mxu0 0.0
    %614 = vmatprep.subr.mxu0 0.0
    %615 = vmatpush2.msra.mxu0 0.0
    %616 = vmatprep.subr.mxu0 0.0
    %617 = vmatpush2.msra.mxu0 0.0
    %618 = vmatprep.subr.mxu0 0.0
    %619 = vmatpush2.msra.mxu0 0.0
    %620 = vmatprep.subr.mxu0 0.0
    %621 = vmatpush2.msra.mxu0 0.0
    %622 = vmatprep.subr.mxu0 0.0
    %623 = vmatpush2.msra.mxu0 0.0
    %624 = vmatprep.mubr.f32.mxu0 0.0
    %625 = vmatmul.mubr.f32.gmra.mxu0 %v558
    %v626 = vpop.f32.mrf.mxu0
    %v627 = vadd.f32 %v556, %v626
    %v628 = vpop.f32.mrf.mxu0
    %629 = vdwg.mxu0
    %v630 = vmax.f32 %v627, 0.0
    %v631 = vld [vmem:[%s5 + $0x60] sm:$0xff]
    %v632 = vld [vmem:[%s5 + $0x68] sm:$0xff]
    %v633 = vld [vmem:[%s5 + $0x70] sm:$0xff]
    %v634 = vld [vmem:[%s5 + $0x78] sm:$0xff]
    %v635 = vld [vmem:[%s5 + $0x101] sm:$0x1]
    %v636 = vlaneseq
    %v637 = vshrl.u32 %v636, 7
    %v638 = vsub.s32 0, %v637
    %v639 = vrot.slane %v635, %v638
    %vm640 = vcmask 261120
    %v642 = vsel %vm640, %v630, 0
    %644 = vmatprep.subr.mxu0 0.0
    %645 = vmatpush1.msra.mxu0 0.0
    %646 = vmatprep.subr.mxu0 0.0
    %647 = vmatpush1.msra.mxu0 0.0
    %648 = vmatprep.subr.mxu0 0.0
    %649 = vmatpush1.msra.mxu0 0.0
    %650 = vmatprep.subr.mxu0 0.0
    %651 = vmatpush1.msra.mxu0 0.0
    %652 = vmatprep.subr.mxu0 0.0
    %653 = vmatpush1.msra.mxu0 0.0
    %654 = vmatprep.subr.mxu0 0.0
    %655 = vmatpush1.msra.mxu0 0.0
    %656 = vmatprep.subr.mxu0 0.0
    %657 = vmatpush1.msra.mxu0 0.0
    %658 = vmatprep.subr.mxu0 0.0
    %659 = vmatpush1.msra.mxu0 0.0
    %660 = vmatprep.subr.mxu0 0.0
    %661 = vmatpush1.msra.mxu0 0.0
    %662 = vmatprep.subr.mxu0 0.0
    %663 = vmatpush1.msra.mxu0 0.0
    %664 = vmatprep.subr.mxu0 0.0
    %665 = vmatpush1.msra.mxu0 0.0
    %666 = vmatprep.subr.mxu0 0.0
    %667 = vmatpush1.msra.mxu0 0.0
    %668 = vmatprep.subr.mxu0 0.0
    %669 = vmatpush1.msra.mxu0 %v634
    %670 = vmatprep.subr.mxu0 0.0
    %671 = vmatpush1.msra.mxu0 %v633
    %672 = vmatprep.subr.mxu0 0.0
    %673 = vmatpush1.msra.mxu0 %v632
    %674 = vmatprep.subr.mxu0 0.0
    %675 = vmatpush1.msra.mxu0 %v631
    %676 = vmatprep.subr.mxu0 0.0
    %677 = vmatpush2.msra.mxu0 0.0
    %678 = vmatprep.subr.mxu0 0.0
    %679 = vmatpush2.msra.mxu0 0.0
    %680 = vmatprep.subr.mxu0 0.0
    %681 = vmatpush2.msra.mxu0 0.0
    %682 = vmatprep.subr.mxu0 0.0
    %683 = vmatpush2.msra.mxu0 0.0
    %684 = vmatprep.subr.mxu0 0.0
    %685 = vmatpush2.msra.mxu0 0.0
    %686 = vmatprep.subr.mxu0 0.0
    %687 = vmatpush2.msra.mxu0 0.0
    %688 = vmatprep.subr.mxu0 0.0
    %689 = vmatpush2.msra.mxu0 0.0
    %690 = vmatprep.subr.mxu0 0.0
    %691 = vmatpush2.msra.mxu0 0.0
    %692 = vmatprep.subr.mxu0 0.0
    %693 = vmatpush2.msra.mxu0 0.0
    %694 = vmatprep.subr.mxu0 0.0
    %695 = vmatpush2.msra.mxu0 0.0
    %696 = vmatprep.subr.mxu0 0.0
    %697 = vmatpush2.msra.mxu0 0.0
    %698 = vmatprep.subr.mxu0 0.0
    %699 = vmatpush2.msra.mxu0 0.0
    %700 = vmatprep.subr.mxu0 0.0
    %701 = vmatpush2.msra.mxu0 0.0
    %702 = vmatprep.subr.mxu0 0.0
    %703 = vmatpush2.msra.mxu0 0.0
    %704 = vmatprep.subr.mxu0 0.0
    %705 = vmatpush2.msra.mxu0 0.0
    %706 = vmatprep.subr.mxu0 0.0
    %707 = vmatpush2.msra.mxu0 0.0
    %708 = vmatprep.mubr.f32.mxu0 0.0
    %709 = vmatmul.mubr.f32.gmra.mxu0 %v642
    %v710 = vpop.f32.mrf.mxu0
    %v711 = vadd.f32 %v639, %v710
    %v712 = vpop.f32.mrf.mxu0
    %713 = vdwg.mxu0
    %v714 = vmax.f32 %v711, 0.0
    %v715 = vld [vmem:[%s5 + $0x80] sm:$0xff]
    %v716 = vld [vmem:[%s5 + $0x88] sm:$0xff]
    %v717 = vld [vmem:[%s5 + $0x90] sm:$0xff]
    %v718 = vld [vmem:[%s5 + $0x98] sm:$0xff]
    %v719 = vld [vmem:[%s5 + $0x102] sm:$0x1]
    %v720 = vlaneseq
    %v721 = vshrl.u32 %v720, 7
    %v722 = vsub.s32 0, %v721
    %v723 = vrot.slane %v719, %v722
    %v725 = vsel %vm640, %v714, 0
    %727 = vmatprep.subr.mxu0 0.0
    %728 = vmatpush1.msra.mxu0 0.0
    %729 = vmatprep.subr.mxu0 0.0
    %730 = vmatpush1.msra.mxu0 0.0
    %731 = vmatprep.subr.mxu0 0.0
    %732 = vmatpush1.msra.mxu0 0.0
    %733 = vmatprep.subr.mxu0 0.0
    %734 = vmatpush1.msra.mxu0 0.0
    %735 = vmatprep.subr.mxu0 0.0
    %736 = vmatpush1.msra.mxu0 0.0
    %737 = vmatprep.subr.mxu0 0.0
    %738 = vmatpush1.msra.mxu0 0.0
    %739 = vmatprep.subr.mxu0 0.0
    %740 = vmatpush1.msra.mxu0 0.0
    %741 = vmatprep.subr.mxu0 0.0
    %742 = vmatpush1.msra.mxu0 0.0
    %743 = vmatprep.subr.mxu0 0.0
    %744 = vmatpush1.msra.mxu0 0.0
    %745 = vmatprep.subr.mxu0 0.0
    %746 = vmatpush1.msra.mxu0 0.0
    %747 = vmatprep.subr.mxu0 0.0
    %748 = vmatpush1.msra.mxu0 0.0
    %749 = vmatprep.subr.mxu0 0.0
    %750 = vmatpush1.msra.mxu0 0.0
    %751 = vmatprep.subr.mxu0 0.0
    %752 = vmatpush1.msra.mxu0 %v718
    %753 = vmatprep.subr.mxu0 0.0
    %754 = vmatpush1.msra.mxu0 %v717
    %755 = vmatprep.subr.mxu0 0.0
    %756 = vmatpush1.msra.mxu0 %v716
    %757 = vmatprep.subr.mxu0 0.0
    %758 = vmatpush1.msra.mxu0 %v715
    %759 = vmatprep.subr.mxu0 0.0
    %760 = vmatpush2.msra.mxu0 0.0
    %761 = vmatprep.subr.mxu0 0.0
    %762 = vmatpush2.msra.mxu0 0.0
    %763 = vmatprep.subr.mxu0 0.0
    %764 = vmatpush2.msra.mxu0 0.0
    %765 = vmatprep.subr.mxu0 0.0
    %766 = vmatpush2.msra.mxu0 0.0
    %767 = vmatprep.subr.mxu0 0.0
    %768 = vmatpush2.msra.mxu0 0.0
    %769 = vmatprep.subr.mxu0 0.0
    %770 = vmatpush2.msra.mxu0 0.0
    %771 = vmatprep.subr.mxu0 0.0
    %772 = vmatpush2.msra.mxu0 0.0
    %773 = vmatprep.subr.mxu0 0.0
    %774 = vmatpush2.msra.mxu0 0.0
    %775 = vmatprep.subr.mxu0 0.0
    %776 = vmatpush2.msra.mxu0 0.0
    %777 = vmatprep.subr.mxu0 0.0
    %778 = vmatpush2.msra.mxu0 0.0
    %779 = vmatprep.subr.mxu0 0.0
    %780 = vmatpush2.msra.mxu0 0.0
    %781 = vmatprep.subr.mxu0 0.0
    %782 = vmatpush2.msra.mxu0 0.0
    %783 = vmatprep.subr.mxu0 0.0
    %784 = vmatpush2.msra.mxu0 0.0
    %785 = vmatprep.subr.mxu0 0.0
    %786 = vmatpush2.msra.mxu0 0.0
    %787 = vmatprep.subr.mxu0 0.0
    %788 = vmatpush2.msra.mxu0 0.0
    %789 = vmatprep.subr.mxu0 0.0
    %790 = vmatpush2.msra.mxu0 0.0
    %791 = vmatprep.mubr.f32.mxu0 0.0
    %792 = vmatmul.mubr.f32.gmra.mxu0 %v725
    %v793 = vpop.f32.mrf.mxu0
    %v794 = vadd.f32 %v723, %v793
    %v795 = vpop.f32.mrf.mxu0
    %796 = vdwg.mxu0
    %v797 = vmax.f32 %v794, 0.0
    %v798 = vadd.f32 %v630, %v797
    %v799 = vld [vmem:[%s5 + $0xa0] sm:$0xff]
    %v800 = vld [vmem:[%s5 + $0xa8] sm:$0xff]
    %v801 = vld [vmem:[%s5 + $0xb0] sm:$0xff]
    %v802 = vld [vmem:[%s5 + $0xb8] sm:$0xff]
    %v803 = vld [vmem:[%s5 + $0x103] sm:$0x1]
    %v804 = vlaneseq
    %v805 = vshrl.u32 %v804, 7
    %v806 = vsub.s32 0, %v805
    %v807 = vrot.slane %v803, %v806
    %v809 = vsel %vm640, %v798, 0
    %811 = vmatprep.subr.mxu0 0.0
    %812 = vmatpush1.msra.mxu0 0.0
    %813 = vmatprep.subr.mxu0 0.0
    %814 = vmatpush1.msra.mxu0 0.0
    %815 = vmatprep.subr.mxu0 0.0
    %816 = vmatpush1.msra.mxu0 0.0
    %817 = vmatprep.subr.mxu0 0.0
    %818 = vmatpush1.msra.mxu0 0.0
    %819 = vmatprep.subr.mxu0 0.0
    %820 = vmatpush1.msra.mxu0 0.0
    %821 = vmatprep.subr.mxu0 0.0
    %822 = vmatpush1.msra.mxu0 0.0
    %823 = vmatprep.subr.mxu0 0.0
    %824 = vmatpush1.msra.mxu0 0.0
    %825 = vmatprep.subr.mxu0 0.0
    %826 = vmatpush1.msra.mxu0 0.0
    %827 = vmatprep.subr.mxu0 0.0
    %828 = vmatpush1.msra.mxu0 0.0
    %829 = vmatprep.subr.mxu0 0.0
    %830 = vmatpush1.msra.mxu0 0.0
    %831 = vmatprep.subr.mxu0 0.0
    %832 = vmatpush1.msra.mxu0 0.0
    %833 = vmatprep.subr.mxu0 0.0
    %834 = vmatpush1.msra.mxu0 0.0
    %835 = vmatprep.subr.mxu0 0.0
    %836 = vmatpush1.msra.mxu0 %v802
    %837 = vmatprep.subr.mxu0 0.0
    %838 = vmatpush1.msra.mxu0 %v801
    %839 = vmatprep.subr.mxu0 0.0
    %840 = vmatpush1.msra.mxu0 %v800
    %841 = vmatprep.subr.mxu0 0.0
    %842 = vmatpush1.msra.mxu0 %v799
    %843 = vmatprep.subr.mxu0 0.0
    %844 = vmatpush2.msra.mxu0 0.0
    %845 = vmatprep.subr.mxu0 0.0
    %846 = vmatpush2.msra.mxu0 0.0
    %847 = vmatprep.subr.mxu0 0.0
    %848 = vmatpush2.msra.mxu0 0.0
    %849 = vmatprep.subr.mxu0 0.0
    %850 = vmatpush2.msra.mxu0 0.0
    %851 = vmatprep.subr.mxu0 0.0
    %852 = vmatpush2.msra.mxu0 0.0
    %853 = vmatprep.subr.mxu0 0.0
    %854 = vmatpush2.msra.mxu0 0.0
    %855 = vmatprep.subr.mxu0 0.0
    %856 = vmatpush2.msra.mxu0 0.0
    %857 = vmatprep.subr.mxu0 0.0
    %858 = vmatpush2.msra.mxu0 0.0
    %859 = vmatprep.subr.mxu0 0.0
    %860 = vmatpush2.msra.mxu0 0.0
    %861 = vmatprep.subr.mxu0 0.0
    %862 = vmatpush2.msra.mxu0 0.0
    %863 = vmatprep.subr.mxu0 0.0
    %864 = vmatpush2.msra.mxu0 0.0
    %865 = vmatprep.subr.mxu0 0.0
    %866 = vmatpush2.msra.mxu0 0.0
    %867 = vmatprep.subr.mxu0 0.0
    %868 = vmatpush2.msra.mxu0 0.0
    %869 = vmatprep.subr.mxu0 0.0
    %870 = vmatpush2.msra.mxu0 0.0
    %871 = vmatprep.subr.mxu0 0.0
    %872 = vmatpush2.msra.mxu0 0.0
    %873 = vmatprep.subr.mxu0 0.0
    %874 = vmatpush2.msra.mxu0 0.0
    %875 = vmatprep.mubr.f32.mxu0 0.0
    %876 = vmatmul.mubr.f32.gmra.mxu0 %v809
    %v877 = vpop.f32.mrf.mxu0
    %v878 = vadd.f32 %v807, %v877
    %v879 = vpop.f32.mrf.mxu0
    %880 = vdwg.mxu0
    %v881 = vmax.f32 %v878, 0.0
    %v882 = vld [vmem:[%s5 + $0xc0] sm:$0xff]
    %v883 = vld [vmem:[%s5 + $0xc8] sm:$0xff]
    %v884 = vld [vmem:[%s5 + $0xd0] sm:$0xff]
    %v885 = vld [vmem:[%s5 + $0xd8] sm:$0xff]
    %v886 = vld [vmem:[%s5 + $0x104] sm:$0x1]
    %v887 = vlaneseq
    %v888 = vshrl.u32 %v887, 7
    %v889 = vsub.s32 0, %v888
    %v890 = vrot.slane %v886, %v889
    %v892 = vsel %vm640, %v881, 0
    %894 = vmatprep.subr.mxu0 0.0
    %895 = vmatpush1.msra.mxu0 0.0
    %896 = vmatprep.subr.mxu0 0.0
    %897 = vmatpush1.msra.mxu0 0.0
    %898 = vmatprep.subr.mxu0 0.0
    %899 = vmatpush1.msra.mxu0 0.0
    %900 = vmatprep.subr.mxu0 0.0
    %901 = vmatpush1.msra.mxu0 0.0
    %902 = vmatprep.subr.mxu0 0.0
    %903 = vmatpush1.msra.mxu0 0.0
    %904 = vmatprep.subr.mxu0 0.0
    %905 = vmatpush1.msra.mxu0 0.0
    %906 = vmatprep.subr.mxu0 0.0
    %907 = vmatpush1.msra.mxu0 0.0
    %908 = vmatprep.subr.mxu0 0.0
    %909 = vmatpush1.msra.mxu0 0.0
    %910 = vmatprep.subr.mxu0 0.0
    %911 = vmatpush1.msra.mxu0 0.0
    %912 = vmatprep.subr.mxu0 0.0
    %913 = vmatpush1.msra.mxu0 0.0
    %914 = vmatprep.subr.mxu0 0.0
    %915 = vmatpush1.msra.mxu0 0.0
    %916 = vmatprep.subr.mxu0 0.0
    %917 = vmatpush1.msra.mxu0 0.0
    %918 = vmatprep.subr.mxu0 0.0
    %919 = vmatpush1.msra.mxu0 %v885
    %920 = vmatprep.subr.mxu0 0.0
    %921 = vmatpush1.msra.mxu0 %v884
    %922 = vmatprep.subr.mxu0 0.0
    %923 = vmatpush1.msra.mxu0 %v883
    %924 = vmatprep.subr.mxu0 0.0
    %925 = vmatpush1.msra.mxu0 %v882
    %926 = vmatprep.subr.mxu0 0.0
    %927 = vmatpush2.msra.mxu0 0.0
    %928 = vmatprep.subr.mxu0 0.0
    %929 = vmatpush2.msra.mxu0 0.0
    %930 = vmatprep.subr.mxu0 0.0
    %931 = vmatpush2.msra.mxu0 0.0
    %932 = vmatprep.subr.mxu0 0.0
    %933 = vmatpush2.msra.mxu0 0.0
    %934 = vmatprep.subr.mxu0 0.0
    %935 = vmatpush2.msra.mxu0 0.0
    %936 = vmatprep.subr.mxu0 0.0
    %937 = vmatpush2.msra.mxu0 0.0
    %938 = vmatprep.subr.mxu0 0.0
    %939 = vmatpush2.msra.mxu0 0.0
    %940 = vmatprep.subr.mxu0 0.0
    %941 = vmatpush2.msra.mxu0 0.0
    %942 = vmatprep.subr.mxu0 0.0
    %943 = vmatpush2.msra.mxu0 0.0
    %944 = vmatprep.subr.mxu0 0.0
    %945 = vmatpush2.msra.mxu0 0.0
    %946 = vmatprep.subr.mxu0 0.0
    %947 = vmatpush2.msra.mxu0 0.0
    %948 = vmatprep.subr.mxu0 0.0
    %949 = vmatpush2.msra.mxu0 0.0
    %950 = vmatprep.subr.mxu0 0.0
    %951 = vmatpush2.msra.mxu0 0.0
    %952 = vmatprep.subr.mxu0 0.0
    %953 = vmatpush2.msra.mxu0 0.0
    %954 = vmatprep.subr.mxu0 0.0
    %955 = vmatpush2.msra.mxu0 0.0
    %956 = vmatprep.subr.mxu0 0.0
    %957 = vmatpush2.msra.mxu0 0.0
    %958 = vmatprep.mubr.f32.mxu0 0.0
    %959 = vmatmul.mubr.f32.gmra.mxu0 %v892
    %v960 = vpop.f32.mrf.mxu0
    %v961 = vadd.f32 %v890, %v960
    %v962 = vpop.f32.mrf.mxu0
    %963 = vdwg.mxu0
    %v964 = vmax.f32 %v961, 0.0
    %v965 = vadd.f32 %v798, %v964
    %v966 = vld [vmem:[%s5 + $0xe0] sm:$0xff]
    %v967 = vld [vmem:[%s5 + $0xe8] sm:$0xff]
    %v968 = vld [vmem:[%s5 + $0xf0] sm:$0xff]
    %v969 = vld [vmem:[%s5 + $0xf8] sm:$0xff]
    %v970 = vld [vmem:[%s5 + $0x105] sm:$0x1]
    %v971 = vlaneseq
    %v972 = vshrl.u32 %v971, 7
    %v973 = vsub.s32 0, %v972
    %v974 = vrot.slane %v970, %v973
    %v976 = vsel %vm640, %v965, 0
    %978 = vmatprep.subr.mxu0 0.0
    %979 = vmatpush1.msra.mxu0 0.0
    %980 = vmatprep.subr.mxu0 0.0
    %981 = vmatpush1.msra.mxu0 0.0
    %982 = vmatprep.subr.mxu0 0.0
    %983 = vmatpush1.msra.mxu0 0.0
    %984 = vmatprep.subr.mxu0 0.0
    %985 = vmatpush1.msra.mxu0 0.0
    %986 = vmatprep.subr.mxu0 0.0
    %987 = vmatpush1.msra.mxu0 0.0
    %988 = vmatprep.subr.mxu0 0.0
    %989 = vmatpush1.msra.mxu0 0.0
    %990 = vmatprep.subr.mxu0 0.0
    %991 = vmatpush1.msra.mxu0 0.0
    %992 = vmatprep.subr.mxu0 0.0
    %993 = vmatpush1.msra.mxu0 0.0
    %994 = vmatprep.subr.mxu0 0.0
    %995 = vmatpush1.msra.mxu0 0.0
    %996 = vmatprep.subr.mxu0 0.0
    %997 = vmatpush1.msra.mxu0 0.0
    %998 = vmatprep.subr.mxu0 0.0
    %999 = vmatpush1.msra.mxu0 0.0
    %1000 = vmatprep.subr.mxu0 0.0
    %1001 = vmatpush1.msra.mxu0 0.0
    %1002 = vmatprep.subr.mxu0 0.0
    %1003 = vmatpush1.msra.mxu0 %v969
    %1004 = vmatprep.subr.mxu0 0.0
    %1005 = vmatpush1.msra.mxu0 %v968
    %1006 = vmatprep.subr.mxu0 0.0
    %1007 = vmatpush1.msra.mxu0 %v967
    %1008 = vmatprep.subr.mxu0 0.0
    %1009 = vmatpush1.msra.mxu0 %v966
    %1010 = vmatprep.subr.mxu0 0.0
    %1011 = vmatpush2.msra.mxu0 0.0
    %1012 = vmatprep.subr.mxu0 0.0
    %1013 = vmatpush2.msra.mxu0 0.0
    %1014 = vmatprep.subr.mxu0 0.0
    %1015 = vmatpush2.msra.mxu0 0.0
    %1016 = vmatprep.subr.mxu0 0.0
    %1017 = vmatpush2.msra.mxu0 0.0
    %1018 = vmatprep.subr.mxu0 0.0
    %1019 = vmatpush2.msra.mxu0 0.0
    %1020 = vmatprep.subr.mxu0 0.0
    %1021 = vmatpush2.msra.mxu0 0.0
    %1022 = vmatprep.subr.mxu0 0.0
    %1023 = vmatpush2.msra.mxu0 0.0
    %1024 = vmatprep.subr.mxu0 0.0
    %1025 = vmatpush2.msra.mxu0 0.0
    %1026 = vmatprep.subr.mxu0 0.0
    %1027 = vmatpush2.msra.mxu0 0.0
    %1028 = vmatprep.subr.mxu0 0.0
    %1029 = vmatpush2.msra.mxu0 0.0
    %1030 = vmatprep.subr.mxu0 0.0
    %1031 = vmatpush2.msra.mxu0 0.0
    %1032 = vmatprep.subr.mxu0 0.0
    %1033 = vmatpush2.msra.mxu0 0.0
    %1034 = vmatprep.subr.mxu0 0.0
    %1035 = vmatpush2.msra.mxu0 0.0
    %1036 = vmatprep.subr.mxu0 0.0
    %1037 = vmatpush2.msra.mxu0 0.0
    %1038 = vmatprep.subr.mxu0 0.0
    %1039 = vmatpush2.msra.mxu0 0.0
    %1040 = vmatprep.subr.mxu0 0.0
    %1041 = vmatpush2.msra.mxu0 0.0
    %1042 = vmatprep.mubr.f32.mxu0 0.0
    %1043 = vmatmul.mubr.f32.gmra.mxu0 %v976
    %v1044 = vpop.f32.mrf.mxu0
    %v1045 = vadd.f32 %v974, %v1044
    %v1046 = vpop.f32.mrf.mxu0
    %1047 = vdwg.mxu0
    %1048 = vst [vmem:[#allocation2] sm:$0xff] %v1045
    // Predicated region
    $region26: #{tpu_custom_call.1} parent=1 // pred_check
      _
    $region27: #{tpu_custom_call.1} parent=1 // pred_check_branch
      %1050 = sbr.rel (0) target = $region29
    $region28: #{tpu_custom_call.1} parent=1 // pred_region
      %s1052 = ssub.s32 128, 128
      %1053 = vsyncadd [#allocation3], %s1052
      %s1055 = sshll.u32 [#allocation2], 4
      %s1056 = int_to_ptr.vmem [resolvable:$true] %s1055
      %1058 = dma.vmem_to_hbm [thread:$0]  %s1056, 128, %s6, [#allocation3]
    $region29: #{tpu_custom_call.1} parent=1 // pred_fallthru
      _
    // Predicated region
    $region30: #{tpu_custom_call.1} parent=1 // pred_check
      _
    $region31: #{tpu_custom_call.1} parent=1 // pred_check_branch
      %1060 = sbr.rel (0) target = $region33
    $region32: #{tpu_custom_call.1} parent=1 // pred_region
      %1061 = dma.done [#allocation3], 128
    $region33: #{tpu_custom_call.1} parent=1 // pred_fallthru
      _
    %1062 = vsyncpa [#allocation3], 1

</llo_original>
